<compile_context>
chip_gen: v6e
topology: v6e:2x2x1
jax: 0.10.0
libtpu: 0.0.40
codegen_flags: <defaults>
</compile_context>

<pallas_src>
import functools
import math

import jax
import jax.numpy as jnp
from jax import lax
from jax.experimental import pallas as pl
from jax.experimental.pallas import tpu as pltpu


def _attention_kernel(x_ref, gamma_ref, wq_ref, wk_ref, wv_ref, wout_ref,
                      o_ref,
                      xn_scr, kT_scr, vT_scr, out_scr,
                      *, heads, dim_head, block_q, compute_dtype, exp_dtype,
                      approx_recip):
    qi = pl.program_id(1)
    d = dim_head

    # ---- once per batch element: RMSNorm + fused K^T / V^T projections ----
    @pl.when(qi == 0)
    def _():
        x = x_ref[0]                                          # (N, DIM) f32
        ss = jnp.sum(x * x, axis=-1, keepdims=True)
        # F.normalize(dim=-1) == x / max(||x||, 1e-12); sqrt(dim) folded in gamma
        xn = x * lax.rsqrt(jnp.maximum(ss, jnp.float32(1e-24)))
        xn = xn * gamma_ref[...]                              # (1, DIM) broadcast
        xn_c = xn.astype(compute_dtype)
        xn_scr[...] = xn_c
        # Fused projections straight into K^T / V^T layout:
        #   kT[i, n] = sum_c Wk[i, c] * xn[n, c]    (contract the shared DIM)
        # -> one lane-dense (inner, N) matmul each, no transpose anywhere.
        kT = lax.dot_general(wk_ref[...], xn_c, (((1,), (1,)), ((), ())),
                             preferred_element_type=jnp.float32
                             ).astype(compute_dtype)          # (inner, N)
        vT = lax.dot_general(wv_ref[...], xn_c, (((1,), (1,)), ((), ())),
                             preferred_element_type=jnp.float32
                             ).astype(compute_dtype)          # (inner, N)
        for h in range(heads):   # static, store-only split (sublane-aligned)
            kT_scr[h] = kT[h * d:(h + 1) * d, :]
            vT_scr[h] = vT[h * d:(h + 1) * d, :]

    # ---- per query block ----
    q_start = pl.multiple_of(qi * block_q, block_q)
    xq = xn_scr[pl.ds(q_start, block_q), :]                   # (bq, DIM)
    out_scr[...] = jnp.zeros_like(out_scr)                    # (bq, DIM) f32

    @pl.loop(0, heads)        # scf.for: one head's (bq, N) sim/p live at a time
    def _(h):
        # softmax scale is pre-folded into Wq on the host
        qh = jnp.dot(xq, wq_ref[h],
                     preferred_element_type=jnp.float32).astype(compute_dtype)
        sim = jnp.dot(qh, kT_scr[h],
                      preferred_element_type=jnp.float32)     # (bq, N) lane-dense
        m = jnp.max(sim, axis=-1, keepdims=True)
        p = jnp.exp((sim - m).astype(exp_dtype))              # bf16 EUP on v6e/v7x
        l = jnp.sum(p.astype(jnp.float32), axis=-1, keepdims=True)
        # contract the shared last (N) dim -> (bq, d); no transpose of V^T
        o_h = lax.dot_general(p.astype(compute_dtype), vT_scr[h],
                              (((1,), (1,)), ((), ())),
                              preferred_element_type=jnp.float32)
        o_h = o_h * pl.reciprocal(l, approx=approx_recip)
        # fuse the output projection per head into the lane-dense accumulator
        out_scr[...] += jnp.dot(o_h.astype(compute_dtype), wout_ref[h],
                                preferred_element_type=jnp.float32)

    o_ref[0] = out_scr[...].astype(o_ref.dtype)               # single wide store


def _device_kind():
    try:
        return jax.devices()[0].device_kind.lower()
    except Exception:
        return ""


def _default_exp_dtype(compute_dtype):
    # bf16 exp uses the bf16 EUP path on v6e / v7x; v5e has no bf16 EUP/VPU,
    # so keep the transcendental in f32 there (and on unknown hardware).
    if jnp.dtype(compute_dtype) == jnp.dtype(jnp.float32):
        return jnp.float32
    kind = _device_kind()
    if ("v6" in kind) or ("v7" in kind):
        return jnp.bfloat16
    return jnp.float32


def _vmem_limit_bytes(N, DIM, inner, block_q, compute_dtype, out_dtype):
    cb = jnp.dtype(compute_dtype).itemsize
    scratch = (N * DIM * cb                 # normalized x
               + 2 * inner * N * cb         # K^T + V^T
               + block_q * DIM * 4)         # f32 output accumulator
    per_buf = (N * DIM * 4                  # x block (f32)
               + DIM * 4                    # gamma
               + 4 * DIM * inner * cb       # Wq + Wk + Wv + Wout
               + block_q * DIM * jnp.dtype(out_dtype).itemsize)
    est = scratch + 2 * per_buf             # default double buffering
    kind = _device_kind()
    phys = (128 << 20) if (("v5" in kind) or ("v6" in kind)) else (64 << 20)
    return int(min(phys, max(32 << 20, int(1.5 * est) + (4 << 20))))


def attention_pallas(x, gamma, wq_t, wkv_t, wout_t, *, heads, dim_head,
                     compute_dtype=jnp.bfloat16, exp_dtype=None):
    """x: (B, N, DIM); gamma: (DIM,); weights pre-transposed to (in, out)."""
    B, N, DIM = x.shape
    inner = heads * dim_head
    assert wq_t.shape == (DIM, inner)
    assert wkv_t.shape == (DIM, 2 * inner)
    assert wout_t.shape == (inner, DIM)

    if exp_dtype is None:
        exp_dtype = _default_exp_dtype(compute_dtype)
    approx_recip = jnp.dtype(compute_dtype) != jnp.dtype(jnp.float32)

    # --- host-side constant folding / layout prep (zero kernel-side cost) ---
    scale = jnp.float32(dim_head ** -0.5)
    gamma_s = (jnp.asarray(gamma, jnp.float32).reshape(1, DIM)
               * jnp.float32(math.sqrt(DIM)))                 # gamma * sqrt(dim)
    # Q: per-head stacked (heads, DIM, d), softmax scale folded in.
    wq_h = ((wq_t * scale).reshape(DIM, heads, dim_head)
            .transpose(1, 0, 2).astype(compute_dtype))
    # K/V fused as (inner, DIM): kernel contracts the shared DIM axis and gets
    # K^T / V^T = (inner, N) lane-dense with no transposes.
    wk_f = wkv_t[:, :inner].T.astype(compute_dtype)           # (inner, DIM)
    wv_f = wkv_t[:, inner:].T.astype(compute_dtype)           # (inner, DIM)
    # Output projection stacked per head: (heads, d, DIM).
    wout_h = wout_t.reshape(heads, dim_head, DIM).astype(compute_dtype)

    # --- query-block tiling: live score matrix is (block_q, N), cap at 256 ---
    block_q = N
    if N > 256:
        for cand in (256, 128, 64, 32, 16):
            if N % cand == 0:
                block_q = cand
                break
        # if N has no such divisor, block_q stays == N (full-extent block).
    num_q = N // block_q
    # TODO(synk): for very long sequences add a KV-block grid axis with an
    # online (flash-style) softmax so K^T/V^T scratch and the score matrix are
    # bounded independent of N (matters first on v7x's 64 MiB VMEM).
    # TODO(synk): when B == 1 add a second parallel axis (e.g. head halves) so
    # both v7x TensorCores are used.

    kernel = functools.partial(
        _attention_kernel, heads=heads, dim_head=dim_head, block_q=block_q,
        compute_dtype=compute_dtype, exp_dtype=exp_dtype,
        approx_recip=approx_recip)

    flops = int(6 * B * N * DIM * inner        # q, k, v projections
                + 4 * B * inner * N * N        # q@k^T and p@v
                + 2 * B * N * inner * DIM      # output projection
                + 8 * B * N * DIM)             # rmsnorm
    transcendentals = int(B * heads * N * N + B * N)
    cb = jnp.dtype(compute_dtype).itemsize
    bytes_accessed = int(2 * B * N * DIM * jnp.dtype(x.dtype).itemsize
                         + 4 * DIM * inner * cb + DIM * 4)

    return pl.pallas_call(
        kernel,
        out_shape=jax.ShapeDtypeStruct((B, N, DIM), x.dtype),
        grid_spec=pltpu.PrefetchScalarGridSpec(
            num_scalar_prefetch=0,
            grid=(B, num_q),
            in_specs=[
                pl.BlockSpec((1, N, DIM), lambda b, q: (b, 0, 0)),             # x
                pl.BlockSpec((1, DIM), lambda b, q: (0, 0)),                   # gamma*sqrt(dim)
                pl.BlockSpec((heads, DIM, dim_head), lambda b, q: (0, 0, 0)),  # Wq*scale
                pl.BlockSpec((inner, DIM), lambda b, q: (0, 0)),               # Wk (fused)
                pl.BlockSpec((inner, DIM), lambda b, q: (0, 0)),               # Wv (fused)
                pl.BlockSpec((heads, dim_head, DIM), lambda b, q: (0, 0, 0)),  # Wout
            ],
            out_specs=pl.BlockSpec((1, block_q, DIM), lambda b, q: (b, q, 0)),
            scratch_shapes=[
                pltpu.VMEM((N, DIM), compute_dtype),               # normalized x
                pltpu.VMEM((heads, dim_head, N), compute_dtype),   # K^T per head
                pltpu.VMEM((heads, dim_head, N), compute_dtype),   # V^T per head
                pltpu.VMEM((block_q, DIM), jnp.float32),           # out accumulator
            ]),
        compiler_params=pltpu.CompilerParams(
            dimension_semantics=("parallel", "arbitrary"),
            vmem_limit_bytes=_vmem_limit_bytes(N, DIM, inner, block_q,
                                               compute_dtype, x.dtype)),
        cost_estimate=pl.CostEstimate(flops=flops,
                                      transcendentals=transcendentals,
                                      bytes_accessed=bytes_accessed),
    )(x, gamma_s, wq_h, wk_f, wv_f, wout_h)


def attention_ref(x, gamma, wq_t, wkv_t, wout_t, *, heads, dim_head):
    """Pure-JAX fp32 reference matching the PyTorch module."""
    B, N, DIM = x.shape
    inner = heads * dim_head
    l2 = jnp.linalg.norm(x, axis=-1, keepdims=True)
    xn = x / jnp.maximum(l2, 1e-12) * jnp.sqrt(jnp.float32(DIM)) \
         * gamma.reshape(1, 1, DIM)
    q = xn @ wq_t
    kv = xn @ wkv_t
    k, v = kv[..., :inner], kv[..., inner:]
    r = lambda t: t.reshape(B, N, heads, dim_head).transpose(0, 2, 1, 3)
    q, k, v = map(r, (q, k, v))
    sim = jnp.einsum('bhid,bhjd->bhij', q, k) * (dim_head ** -0.5)
    attn = jax.nn.softmax(sim, axis=-1)
    out = jnp.einsum('bhij,bhjd->bhid', attn, v)
    out = out.transpose(0, 2, 1, 3).reshape(B, N, inner)
    return out @ wout_t


if __name__ == "__main__":
    # Small shapes consistent with Attention(dim=32, dim_head=16, heads=4).
    B, N, DIM = 2, 8, 32
    HEADS, DIM_HEAD = 4, 16
    INNER = HEADS * DIM_HEAD

    key = jax.random.PRNGKey(0)
    kx, kq, kkv, ko = jax.random.split(key, 4)

    x = jax.random.normal(kx, (B, N, DIM), dtype=jnp.float32)

    # Parameter init matching the module's __init__:
    #  - gamma: ones(DIM);  to_q/to_kv: Linear(bias=False) uniform init;
    #  - to_out: nn.init.zeros_.
    gamma = jnp.ones((DIM,), dtype=jnp.float32)
    bound = 1.0 / math.sqrt(DIM)
    wq_t = jax.random.uniform(kq, (DIM, INNER), jnp.float32, -bound, bound)
    wkv_t = jax.random.uniform(kkv, (DIM, 2 * INNER), jnp.float32, -bound, bound)
    wout_zero = jnp.zeros((INNER, DIM), jnp.float32)          # nn.init.zeros_
    # non-zero Wout so the numerical check exercises the attention path
    bo = 1.0 / math.sqrt(INNER)
    wout_rand = jax.random.uniform(ko, (INNER, DIM), jnp.float32, -bo, bo)

    # 1) module-faithful forward (zero-initialized to_out) -> all zeros
    out = jax.block_until_ready(
        attention_pallas(x, gamma, wq_t, wkv_t, wout_zero,
                         heads=HEADS, dim_head=DIM_HEAD))
    assert out.shape == (B, N, DIM)
    assert jnp.allclose(out, 0.0)

    # 2) correctness of the full path with a random Wout (f32 and bf16 compute)
    ref = attention_ref(x, gamma, wq_t, wkv_t, wout_rand,
                        heads=HEADS, dim_head=DIM_HEAD)
    out_f32 = jax.block_until_ready(
        attention_pallas(x, gamma, wq_t, wkv_t, wout_rand,
                         heads=HEADS, dim_head=DIM_HEAD,
                         compute_dtype=jnp.float32))
    out_bf16 = jax.block_until_ready(
        attention_pallas(x, gamma, wq_t, wkv_t, wout_rand,
                         heads=HEADS, dim_head=DIM_HEAD,
                         compute_dtype=jnp.bfloat16))
    assert jnp.allclose(out_f32, ref, atol=5e-3, rtol=5e-3), \
        float(jnp.max(jnp.abs(out_f32 - ref)))
    assert jnp.allclose(out_bf16, ref, atol=5e-2, rtol=5e-2), \
        float(jnp.max(jnp.abs(out_bf16 - ref)))

    print("KERNEL_OK")
</pallas_src>

<mosaic_0001>
module attributes {stable_mosaic.version = 11 : i64} {
  func.func @_attention_kernel(%arg0: i32, %arg1: i32, %arg2: memref<1x8x32xf32, #tpu.memory_space<vmem>>, %arg3: memref<1x32xf32, #tpu.memory_space<vmem>>, %arg4: memref<4x32x16xbf16, #tpu.memory_space<vmem>>, %arg5: memref<64x32xbf16, #tpu.memory_space<vmem>>, %arg6: memref<64x32xbf16, #tpu.memory_space<vmem>>, %arg7: memref<4x16x32xbf16, #tpu.memory_space<vmem>>, %arg8: memref<1x8x32xf32, #tpu.memory_space<vmem>>, %arg9: memref<8x32xbf16, #tpu.memory_space<vmem>>, %arg10: memref<4x16x8xbf16, #tpu.memory_space<vmem>>, %arg11: memref<4x16x8xbf16, #tpu.memory_space<vmem>>, %arg12: memref<8x32xf32, #tpu.memory_space<vmem>>) attributes {dimension_semantics = [#tpu.dimension_semantics<parallel>, #tpu.dimension_semantics<arbitrary>], iteration_bounds = array<i64: 2, 1>, scalar_prefetch = 0 : i64, scratch_operands = 4 : i64, tpu.core_type = #tpu.core_type<tc>, window_params = [{transform_indices = @transform_0, window_bounds = array<i64: 1, 8, 32>}, {pipeline_mode = #tpu.pipeline_mode<synchronous>, transform_indices = @transform_1, window_bounds = array<i64: 1, 32>}, {pipeline_mode = #tpu.pipeline_mode<synchronous>, transform_indices = @transform_2, window_bounds = array<i64: 4, 32, 16>}, {pipeline_mode = #tpu.pipeline_mode<synchronous>, transform_indices = @transform_3, window_bounds = array<i64: 64, 32>}, {pipeline_mode = #tpu.pipeline_mode<synchronous>, transform_indices = @transform_4, window_bounds = array<i64: 64, 32>}, {pipeline_mode = #tpu.pipeline_mode<synchronous>, transform_indices = @transform_5, window_bounds = array<i64: 4, 16, 32>}, {transform_indices = @transform_6, window_bounds = array<i64: 1, 8, 32>}]} {
    %c0_i32 = arith.constant 0 : i32
    %0 = arith.cmpi eq, %arg1, %c0_i32 : i32
    %1 = arith.extui %0 : i1 to i32
    %c0_i32_0 = arith.constant 0 : i32
    %2 = arith.cmpi ne, %1, %c0_i32_0 : i32
    scf.if %2 {
      %c0_10 = arith.constant 0 : index
      %c0_11 = arith.constant 0 : index
      %c0_12 = arith.constant 0 : index
      %14 = vector.load %arg2[%c0_10, %c0_11, %c0_12] : memref<1x8x32xf32, #tpu.memory_space<vmem>>, vector<1x8x32xf32>
      %15 = vector.shape_cast %14 : vector<1x8x32xf32> to vector<8x32xf32>
      %16 = arith.mulf %15, %15 : vector<8x32xf32>
      %cst_13 = arith.constant dense<0.000000e+00> : vector<8xf32>
      %17 = vector.multi_reduction <add>, %16, %cst_13 [1] : vector<8x32xf32> to vector<8xf32>
      %18 = vector.shape_cast %17 : vector<8xf32> to vector<8x1xf32>
      %cst_14 = arith.constant 1.000000e-24 : f32
      %19 = vector.broadcast %cst_14 : f32 to vector<8x1xf32>
      %20 = arith.maximumf %18, %19 : vector<8x1xf32>
      %21 = math.rsqrt %20 : vector<8x1xf32>
      %22 = vector.broadcast %21 : vector<8x1xf32> to vector<8x32xf32>
      %23 = arith.mulf %15, %22 : vector<8x32xf32>
      %c0_15 = arith.constant 0 : index
      %c0_16 = arith.constant 0 : index
      %24 = vector.load %arg3[%c0_15, %c0_16] : memref<1x32xf32, #tpu.memory_space<vmem>>, vector<1x32xf32>
      %25 = vector.broadcast %24 : vector<1x32xf32> to vector<8x32xf32>
      %26 = arith.mulf %23, %25 : vector<8x32xf32>
      %27 = arith.truncf %26 : vector<8x32xf32> to vector<8x32xbf16>
      %c0_17 = arith.constant 0 : index
      %c0_18 = arith.constant 0 : index
      %28 = vector.load %arg9[%c0_17, %c0_18] : memref<8x32xbf16, #tpu.memory_space<vmem>>, vector<8x32xbf16>
      tpu.vector_store %arg9[%c0_17, %c0_18], %27 {strides = array<i32>} : memref<8x32xbf16, #tpu.memory_space<vmem>>, vector<8x32xbf16>,
      %c0_19 = arith.constant 0 : index
      %c0_20 = arith.constant 0 : index
      %29 = vector.load %arg5[%c0_19, %c0_20] : memref<64x32xbf16, #tpu.memory_space<vmem>>, vector<64x32xbf16>
      %cst_21 = arith.constant dense<0.000000e+00> : vector<64x8xf32>
      %30 = tpu.matmul %29, %27, %cst_21 {dimension_numbers = #tpu.dot_dimension_numbers<[1], [1], [0], [0], [0, 0, 1, 0], [], []>} : vector<64x32xbf16>, vector<8x32xbf16>, vector<64x8xf32> -> vector<64x8xf32>
      %31 = arith.truncf %30 : vector<64x8xf32> to vector<64x8xbf16>
      %c0_22 = arith.constant 0 : index
      %c0_23 = arith.constant 0 : index
      %32 = vector.load %arg6[%c0_22, %c0_23] : memref<64x32xbf16, #tpu.memory_space<vmem>>, vector<64x32xbf16>
      %cst_24 = arith.constant dense<0.000000e+00> : vector<64x8xf32>
      %33 = tpu.matmul %32, %27, %cst_24 {dimension_numbers = #tpu.dot_dimension_numbers<[1], [1], [0], [0], [0, 0, 1, 0], [], []>} : vector<64x32xbf16>, vector<8x32xbf16>, vector<64x8xf32> -> vector<64x8xf32>
      %34 = arith.truncf %33 : vector<64x8xf32> to vector<64x8xbf16>
      %35 = vector.extract_strided_slice %31 {offsets = [0, 0], sizes = [16, 8], strides = [1, 1]} : vector<64x8xbf16> to vector<16x8xbf16>
      %c0_25 = arith.constant 0 : index
      %c0_26 = arith.constant 0 : index
      %c0_27 = arith.constant 0 : index
      %36 = vector.load %arg10[%c0_25, %c0_26, %c0_27] : memref<4x16x8xbf16, #tpu.memory_space<vmem>>, vector<1x16x8xbf16>
      %37 = vector.shape_cast %36 : vector<1x16x8xbf16> to vector<16x8xbf16>
      %38 = vector.shape_cast %35 : vector<16x8xbf16> to vector<1x16x8xbf16>
      tpu.vector_store %arg10[%c0_25, %c0_26, %c0_27], %38 {strides = array<i32>} : memref<4x16x8xbf16, #tpu.memory_space<vmem>>, vector<1x16x8xbf16>,
      %39 = vector.extract_strided_slice %34 {offsets = [0, 0], sizes = [16, 8], strides = [1, 1]} : vector<64x8xbf16> to vector<16x8xbf16>
      %c0_28 = arith.constant 0 : index
      %c0_29 = arith.constant 0 : index
      %c0_30 = arith.constant 0 : index
      %40 = vector.load %arg11[%c0_28, %c0_29, %c0_30] : memref<4x16x8xbf16, #tpu.memory_space<vmem>>, vector<1x16x8xbf16>
      %41 = vector.shape_cast %40 : vector<1x16x8xbf16> to vector<16x8xbf16>
      %42 = vector.shape_cast %39 : vector<16x8xbf16> to vector<1x16x8xbf16>
      tpu.vector_store %arg11[%c0_28, %c0_29, %c0_30], %42 {strides = array<i32>} : memref<4x16x8xbf16, #tpu.memory_space<vmem>>, vector<1x16x8xbf16>,
      %43 = vector.extract_strided_slice %31 {offsets = [16, 0], sizes = [16, 8], strides = [1, 1]} : vector<64x8xbf16> to vector<16x8xbf16>
      %c1 = arith.constant 1 : index
      %c0_31 = arith.constant 0 : index
      %c0_32 = arith.constant 0 : index
      %44 = vector.load %arg10[%c1, %c0_31, %c0_32] : memref<4x16x8xbf16, #tpu.memory_space<vmem>>, vector<1x16x8xbf16>
      %45 = vector.shape_cast %44 : vector<1x16x8xbf16> to vector<16x8xbf16>
      %46 = vector.shape_cast %43 : vector<16x8xbf16> to vector<1x16x8xbf16>
      tpu.vector_store %arg10[%c1, %c0_31, %c0_32], %46 {strides = array<i32>} : memref<4x16x8xbf16, #tpu.memory_space<vmem>>, vector<1x16x8xbf16>,
      %47 = vector.extract_strided_slice %34 {offsets = [16, 0], sizes = [16, 8], strides = [1, 1]} : vector<64x8xbf16> to vector<16x8xbf16>
      %c1_33 = arith.constant 1 : index
      %c0_34 = arith.constant 0 : index
      %c0_35 = arith.constant 0 : index
      %48 = vector.load %arg11[%c1_33, %c0_34, %c0_35] : memref<4x16x8xbf16, #tpu.memory_space<vmem>>, vector<1x16x8xbf16>
      %49 = vector.shape_cast %48 : vector<1x16x8xbf16> to vector<16x8xbf16>
      %50 = vector.shape_cast %47 : vector<16x8xbf16> to vector<1x16x8xbf16>
      tpu.vector_store %arg11[%c1_33, %c0_34, %c0_35], %50 {strides = array<i32>} : memref<4x16x8xbf16, #tpu.memory_space<vmem>>, vector<1x16x8xbf16>,
      %51 = vector.extract_strided_slice %31 {offsets = [32, 0], sizes = [16, 8], strides = [1, 1]} : vector<64x8xbf16> to vector<16x8xbf16>
      %c2 = arith.constant 2 : index
      %c0_36 = arith.constant 0 : index
      %c0_37 = arith.constant 0 : index
      %52 = vector.load %arg10[%c2, %c0_36, %c0_37] : memref<4x16x8xbf16, #tpu.memory_space<vmem>>, vector<1x16x8xbf16>
      %53 = vector.shape_cast %52 : vector<1x16x8xbf16> to vector<16x8xbf16>
      %54 = vector.shape_cast %51 : vector<16x8xbf16> to vector<1x16x8xbf16>
      tpu.vector_store %arg10[%c2, %c0_36, %c0_37], %54 {strides = array<i32>} : memref<4x16x8xbf16, #tpu.memory_space<vmem>>, vector<1x16x8xbf16>,
      %55 = vector.extract_strided_slice %34 {offsets = [32, 0], sizes = [16, 8], strides = [1, 1]} : vector<64x8xbf16> to vector<16x8xbf16>
      %c2_38 = arith.constant 2 : index
      %c0_39 = arith.constant 0 : index
      %c0_40 = arith.constant 0 : index
      %56 = vector.load %arg11[%c2_38, %c0_39, %c0_40] : memref<4x16x8xbf16, #tpu.memory_space<vmem>>, vector<1x16x8xbf16>
      %57 = vector.shape_cast %56 : vector<1x16x8xbf16> to vector<16x8xbf16>
      %58 = vector.shape_cast %55 : vector<16x8xbf16> to vector<1x16x8xbf16>
      tpu.vector_store %arg11[%c2_38, %c0_39, %c0_40], %58 {strides = array<i32>} : memref<4x16x8xbf16, #tpu.memory_space<vmem>>, vector<1x16x8xbf16>,
      %59 = vector.extract_strided_slice %31 {offsets = [48, 0], sizes = [16, 8], strides = [1, 1]} : vector<64x8xbf16> to vector<16x8xbf16>
      %c3 = arith.constant 3 : index
      %c0_41 = arith.constant 0 : index
      %c0_42 = arith.constant 0 : index
      %60 = vector.load %arg10[%c3, %c0_41, %c0_42] : memref<4x16x8xbf16, #tpu.memory_space<vmem>>, vector<1x16x8xbf16>
      %61 = vector.shape_cast %60 : vector<1x16x8xbf16> to vector<16x8xbf16>
      %62 = vector.shape_cast %59 : vector<16x8xbf16> to vector<1x16x8xbf16>
      tpu.vector_store %arg10[%c3, %c0_41, %c0_42], %62 {strides = array<i32>} : memref<4x16x8xbf16, #tpu.memory_space<vmem>>, vector<1x16x8xbf16>,
      %63 = vector.extract_strided_slice %34 {offsets = [48, 0], sizes = [16, 8], strides = [1, 1]} : vector<64x8xbf16> to vector<16x8xbf16>
      %c3_43 = arith.constant 3 : index
      %c0_44 = arith.constant 0 : index
      %c0_45 = arith.constant 0 : index
      %64 = vector.load %arg11[%c3_43, %c0_44, %c0_45] : memref<4x16x8xbf16, #tpu.memory_space<vmem>>, vector<1x16x8xbf16>
      %65 = vector.shape_cast %64 : vector<1x16x8xbf16> to vector<16x8xbf16>
      %66 = vector.shape_cast %63 : vector<16x8xbf16> to vector<1x16x8xbf16>
      tpu.vector_store %arg11[%c3_43, %c0_44, %c0_45], %66 {strides = array<i32>} : memref<4x16x8xbf16, #tpu.memory_space<vmem>>, vector<1x16x8xbf16>,
    } else {
    }
    %c8_i32 = arith.constant 8 : i32
    %3 = arith.muli %arg1, %c8_i32 : i32
    %4 = tpu.assume_multiple %3, 8 : i32
    %5 = arith.index_cast %4 : i32 to index
    %c0 = arith.constant 0 : index
    %6 = vector.load %arg9[%5, %c0] : memref<8x32xbf16, #tpu.memory_space<vmem>>, vector<8x32xbf16>
    %cst = arith.constant 0.000000e+00 : f32
    %7 = vector.broadcast %cst : f32 to vector<8x32xf32>
    %c0_1 = arith.constant 0 : index
    %c0_2 = arith.constant 0 : index
    %8 = vector.load %arg12[%c0_1, %c0_2] : memref<8x32xf32, #tpu.memory_space<vmem>>, vector<8x32xf32>
    tpu.vector_store %arg12[%c0_1, %c0_2], %7 {strides = array<i32>} : memref<8x32xf32, #tpu.memory_space<vmem>>, vector<8x32xf32>,
    %c0_i32_3 = arith.constant 0 : i32
    %c4_i32 = arith.constant 4 : i32
    %9 = arith.addi %c0_i32_3, %c4_i32 : i32
    %c1_i32 = arith.constant 1 : i32
    scf.for %arg13 = %c0_i32_3 to %9 step %c1_i32  : i32 {
      %c1_i32_10 = arith.constant 1 : i32
      %14 = arith.muli %arg13, %c1_i32_10 : i32
      %c0_i32_11 = arith.constant 0 : i32
      %15 = arith.addi %c0_i32_11, %14 : i32
      %16 = arith.index_cast %15 : i32 to index
      %c0_12 = arith.constant 0 : index
      %c0_13 = arith.constant 0 : index
      %17 = vector.load %arg4[%16, %c0_12, %c0_13] : memref<4x32x16xbf16, #tpu.memory_space<vmem>>, vector<1x32x16xbf16>
      %18 = vector.shape_cast %17 : vector<1x32x16xbf16> to vector<32x16xbf16>
      %cst_14 = arith.constant dense<0.000000e+00> : vector<8x16xf32>
      %19 = tpu.matmul %6, %18, %cst_14 {dimension_numbers = #tpu.dot_dimension_numbers<[1], [0], [0], [1], [0, 0, 1, 1], [], []>} : vector<8x32xbf16>, vector<32x16xbf16>, vector<8x16xf32> -> vector<8x16xf32>
      %20 = arith.truncf %19 : vector<8x16xf32> to vector<8x16xbf16>
      %21 = arith.index_cast %15 : i32 to index
      %c0_15 = arith.constant 0 : index
      %c0_16 = arith.constant 0 : index
      %22 = vector.load %arg10[%21, %c0_15, %c0_16] : memref<4x16x8xbf16, #tpu.memory_space<vmem>>, vector<1x16x8xbf16>
      %23 = vector.shape_cast %22 : vector<1x16x8xbf16> to vector<16x8xbf16>
      %cst_17 = arith.constant dense<0.000000e+00> : vector<8x8xf32>
      %24 = tpu.matmul %20, %23, %cst_17 {dimension_numbers = #tpu.dot_dimension_numbers<[1], [0], [0], [1], [0, 0, 1, 1], [], []>} : vector<8x16xbf16>, vector<16x8xbf16>, vector<8x8xf32> -> vector<8x8xf32>
      %cst_18 = arith.constant dense<0xFF800000> : vector<8xf32>
      %25 = vector.multi_reduction <maximumf>, %24, %cst_18 [1] : vector<8x8xf32> to vector<8xf32>
      %26 = vector.shape_cast %25 : vector<8xf32> to vector<8x1xf32>
      %27 = vector.broadcast %26 : vector<8x1xf32> to vector<8x8xf32>
      %28 = arith.subf %24, %27 : vector<8x8xf32>
      %29 = math.exp %28 : vector<8x8xf32>
      %cst_19 = arith.constant dense<0.000000e+00> : vector<8xf32>
      %30 = vector.multi_reduction <add>, %29, %cst_19 [1] : vector<8x8xf32> to vector<8xf32>
      %31 = vector.shape_cast %30 : vector<8xf32> to vector<8x1xf32>
      %32 = arith.truncf %29 : vector<8x8xf32> to vector<8x8xbf16>
      %33 = arith.index_cast %15 : i32 to index
      %c0_20 = arith.constant 0 : index
      %c0_21 = arith.constant 0 : index
      %34 = vector.load %arg11[%33, %c0_20, %c0_21] : memref<4x16x8xbf16, #tpu.memory_space<vmem>>, vector<1x16x8xbf16>
      %35 = vector.shape_cast %34 : vector<1x16x8xbf16> to vector<16x8xbf16>
      %cst_22 = arith.constant dense<0.000000e+00> : vector<8x16xf32>
      %36 = tpu.matmul %32, %35, %cst_22 {dimension_numbers = #tpu.dot_dimension_numbers<[1], [1], [0], [0], [0, 0, 1, 0], [], []>} : vector<8x8xbf16>, vector<16x8xbf16>, vector<8x16xf32> -> vector<8x16xf32>
      %37 = tpu.reciprocal %31 {approx = true} : vector<8x1xf32> -> vector<8x1xf32>
      %38 = vector.broadcast %37 : vector<8x1xf32> to vector<8x16xf32>
      %39 = arith.mulf %36, %38 : vector<8x16xf32>
      %c0_23 = arith.constant 0 : index
      %c0_24 = arith.constant 0 : index
      %40 = vector.load %arg12[%c0_23, %c0_24] : memref<8x32xf32, #tpu.memory_space<vmem>>, vector<8x32xf32>
      %41 = arith.truncf %39 : vector<8x16xf32> to vector<8x16xbf16>
      %42 = arith.index_cast %15 : i32 to index
      %c0_25 = arith.constant 0 : index
      %c0_26 = arith.constant 0 : index
      %43 = vector.load %arg7[%42, %c0_25, %c0_26] : memref<4x16x32xbf16, #tpu.memory_space<vmem>>, vector<1x16x32xbf16>
      %44 = vector.shape_cast %43 : vector<1x16x32xbf16> to vector<16x32xbf16>
      %cst_27 = arith.constant dense<0.000000e+00> : vector<8x32xf32>
      %45 = tpu.matmul %41, %44, %cst_27 {dimension_numbers = #tpu.dot_dimension_numbers<[1], [0], [0], [1], [0, 0, 1, 1], [], []>} : vector<8x16xbf16>, vector<16x32xbf16>, vector<8x32xf32> -> vector<8x32xf32>
      %46 = arith.addf %40, %45 : vector<8x32xf32>
      %c0_28 = arith.constant 0 : index
      %c0_29 = arith.constant 0 : index
      %47 = vector.load %arg12[%c0_28, %c0_29] : memref<8x32xf32, #tpu.memory_space<vmem>>, vector<8x32xf32>
      tpu.vector_store %arg12[%c0_28, %c0_29], %46 {strides = array<i32>} : memref<8x32xf32, #tpu.memory_space<vmem>>, vector<8x32xf32>,
    }
    %c4_i32_4 = arith.constant 4 : i32
    %c0_5 = arith.constant 0 : index
    %c0_6 = arith.constant 0 : index
    %10 = vector.load %arg12[%c0_5, %c0_6] : memref<8x32xf32, #tpu.memory_space<vmem>>, vector<8x32xf32>
    %c0_7 = arith.constant 0 : index
    %c0_8 = arith.constant 0 : index
    %c0_9 = arith.constant 0 : index
    %11 = vector.load %arg8[%c0_7, %c0_8, %c0_9] : memref<1x8x32xf32, #tpu.memory_space<vmem>>, vector<1x8x32xf32>
    %12 = vector.shape_cast %11 : vector<1x8x32xf32> to vector<8x32xf32>
    %13 = vector.shape_cast %10 : vector<8x32xf32> to vector<1x8x32xf32>
    tpu.vector_store %arg8[%c0_7, %c0_8, %c0_9], %13 {strides = array<i32>} : memref<1x8x32xf32, #tpu.memory_space<vmem>>, vector<1x8x32xf32>,
    return
  }
  func.func @transform_0(%arg0: i32, %arg1: i32) -> (i32, i32, i32) {
    %c0_i32 = arith.constant 0 : i32
    %c0_i32_0 = arith.constant 0 : i32
    %c0_i32_1 = arith.constant 0 : i32
    return %arg0, %c0_i32, %c0_i32_0 : i32, i32, i32
  }
  func.func @transform_1(%arg0: i32, %arg1: i32) -> (i32, i32) {
    %c0_i32 = arith.constant 0 : i32
    %c0_i32_0 = arith.constant 0 : i32
    %c0_i32_1 = arith.constant 0 : i32
    return %c0_i32, %c0_i32_0 : i32, i32
  }
  func.func @transform_2(%arg0: i32, %arg1: i32) -> (i32, i32, i32) {
    %c0_i32 = arith.constant 0 : i32
    %c0_i32_0 = arith.constant 0 : i32
    %c0_i32_1 = arith.constant 0 : i32
    %c0_i32_2 = arith.constant 0 : i32
    return %c0_i32, %c0_i32_0, %c0_i32_1 : i32, i32, i32
  }
  func.func @transform_3(%arg0: i32, %arg1: i32) -> (i32, i32) {
    %c0_i32 = arith.constant 0 : i32
    %c0_i32_0 = arith.constant 0 : i32
    %c0_i32_1 = arith.constant 0 : i32
    return %c0_i32, %c0_i32_0 : i32, i32
  }
  func.func @transform_4(%arg0: i32, %arg1: i32) -> (i32, i32) {
    %c0_i32 = arith.constant 0 : i32
    %c0_i32_0 = arith.constant 0 : i32
    %c0_i32_1 = arith.constant 0 : i32
    return %c0_i32, %c0_i32_0 : i32, i32
  }
  func.func @transform_5(%arg0: i32, %arg1: i32) -> (i32, i32, i32) {
    %c0_i32 = arith.constant 0 : i32
    %c0_i32_0 = arith.constant 0 : i32
    %c0_i32_1 = arith.constant 0 : i32
    %c0_i32_2 = arith.constant 0 : i32
    return %c0_i32, %c0_i32_0, %c0_i32_1 : i32, i32, i32
  }
  func.func @transform_6(%arg0: i32, %arg1: i32) -> (i32, i32, i32) {
    %c0_i32 = arith.constant 0 : i32
    %c0_i32_0 = arith.constant 0 : i32
    return %arg0, %arg1, %c0_i32 : i32, i32, i32
  }
}

</mosaic_0001>

<llo_original>
// kernel: tpu_custom_call.1
$region0: #{tpu_custom_call.1}
  #allocation0 [shape = 'u32[]', space=smem, size = 0x4, offset = 0x4, fixed_abs, tag = 'smem constant byte address 0x4 - core index']
  #allocation1 [shape = 'u32[144,128]{1,0:T(1,128)}', space=vmem, size = 0x12000, scoped, tag = 'internal scratch']
  #allocation2 [shape = 'bf16[8,32]{1,0:T(8,128)(2,1)}', space=vmem, size = 0x800, scoped, tag = 'scratch operand']
  #allocation3 [shape = 'bf16[4,16,8]{2,1,0:T(8,128)(2,1)}', space=vmem, size = 0x4000, scoped, tag = 'scratch operand']
  #allocation4 [shape = 'bf16[4,16,8]{2,1,0:T(8,128)(2,1)}', space=vmem, size = 0x4000, scoped, tag = 'scratch operand']
  #allocation5 [shape = 'f32[8,32]{1,0:T(8,128)}', space=vmem, size = 0x1000, scoped, tag = 'scratch operand']
  %s0 = inlined_call_operand.vmem [shape: f32[2,8,32], index: 0, kind: input, shape index: {}]
  %s1 = inlined_call_operand.vmem [shape: f32[1,32], index: 1, kind: input, shape index: {}]
  %s2 = inlined_call_operand.vmem [shape: bf16[4,32,16], index: 2, kind: input, shape index: {}]
  %s3 = inlined_call_operand.vmem [shape: bf16[64,32], index: 3, kind: input, shape index: {}]
  %s4 = inlined_call_operand.vmem [shape: bf16[64,32], index: 4, kind: input, shape index: {}]
  %s5 = inlined_call_operand.vmem [shape: bf16[4,16,32], index: 5, kind: input, shape index: {}]
  %s6 = inlined_call_operand.hbm [shape: f32[2,8,32], index: 6, kind: output, shape index: {}]
  %s7 = sld [smem:[#allocation0]]
  $region68: #{tpu_custom_call.1} parent=0
    _
  %s9 = ssub.s32 1, %s7
  %s10 = scalar_select 0, %s9, %s7
  $region1: #{tpu_custom_call.1} parent=0
    #allocation6 [shape = 'u8[8192]{0}', space=vmem, size = 0x2000, scoped, tag = 'output window, operand 0']
    #allocation7 [shape = 's32[2]{0}', space=sflag, size = 0x8, scoped, tag = 'scoped memory for tpu_custom_call.1']
    %11 = vsyncpa [#allocation7], 0
    %s12 = scalar_lea.sflag [#allocation7], 1
    %13 = vsyncpa %s12, 0
    loop: start=0, step=1, limit=4
    $region2: #{tpu_custom_call.1} parent=1 // loop_pre_header
      _
    $region3: #{tpu_custom_call.1} parent=1 // loop_header
      %s15 = sphi 0, %s19
      %p16 = scmp.ge.s32.totalorder %s15, 4
      %s22 = sphi 0, %s34
      %s23 = sphi 0, %s30
      %s24 = sphi 0, %s22
      %s25 = sphi 0, %s23
      %s26 = sphi 0, %s24
      %s27 = sphi 0, %s25
      %s37 = sphi 0, %s39
      %s40 = sphi 0, %s37
      %s41 = sphi 0, %s40
      %s57 = sphi 0, %s41
      %s61 = sphi 0, %s61
      %s63 = sphi 0, %s61
      %s64 = sphi 0, %s63
      %s78 = sphi 0, %s64
      %s82 = sphi 0, %s82
      %s84 = sphi 0, %s82
      %s85 = sphi 0, %s84
      %s99 = sphi 0, %s85
      %s103 = sphi 0, %s103
      %s105 = sphi 0, %s103
      %s106 = sphi 0, %s105
      %s120 = sphi 0, %s106
      %s124 = sphi 0, %s124
      %s126 = sphi 0, %s124
      %s127 = sphi 0, %s126
      %s141 = sphi 0, %s127
      %s145 = sphi 0, %s145
      %s147 = sphi 0, %s145
      %s148 = sphi 0, %s147
      %s162 = sphi 0, %s148
      %s170 = sphi 0, %s172
      %s173 = sphi 0, %s170
      %s174 = sphi 0, %s173
      %s190 = sphi 0, %s174
    $region4: #{tpu_custom_call.1} parent=1 // loop_header_branch
      %18 = sbr.rel (%p16) target = $region8
    $region5: #{tpu_custom_call.1} parent=1 // loop_body
      %s20 = ssub.s32 %s15, 1
      %s21 = ssub.s32 %s15, 2
      %s28 = sadd.s32 1, %s23
      %p29 = scmp.ge.s32.totalorder %s28, 1
      %s30 = scalar_select %p29, 0, %s28
      %s31 = sadd.s32 1, %s22
      %s32 = scalar_select %p29, %s31, %s22
      %p33 = scmp.ge.s32.totalorder %s32, 2
      %s34 = scalar_select %p33, 0, %s32
      %s35 = ssub.s32 %s22, %s34
      %p36 = scmp.eq.s32.totalorder %s35, 0
      %s38 = sadd.s32 %s37, 1
      %s39 = scalar_select %p36, %s37, %s38
      %p42 = pneg %p36
      %p43 = scmp.eq.s32.totalorder %s15, 1
      %p44 = por %p42, %p43
      %p45 = scmp.ne.s32.totalorder %s37, %s40
      %p46 = scmp.eq.s32.totalorder %s15, 0
      %p47 = por %p45, %p46
      %p48 = scmp.ne.s32.totalorder %s37, %s40
      %p49 = scmp.eq.s32.totalorder %s20, 1
      %p50 = por %p48, %p49
      %p51 = scmp.ne.s32.totalorder %s40, %s41
      %p52 = scmp.eq.s32.totalorder %s20, 0
      %p53 = por %p51, %p52
      %p54 = scmp.ne.s32.totalorder %s40, %s41
      %p55 = scmp.eq.s32.totalorder %s21, 1
      %p56 = por %p54, %p55
      %p58 = scmp.ne.s32.totalorder %s41, %s57
      %p59 = scmp.eq.s32.totalorder %s21, 0
      %p60 = por %p58, %p59
      %s62 = sadd.s32 %s61, 1
      %p65 = scmp.eq.s32.totalorder %s15, 1
      %p66 = scmp.ne.s32.totalorder %s61, %s63
      %p67 = scmp.eq.s32.totalorder %s15, 0
      %p68 = por %p66, %p67
      %p69 = scmp.ne.s32.totalorder %s61, %s63
      %p70 = scmp.eq.s32.totalorder %s20, 1
      %p71 = por %p69, %p70
      %p72 = scmp.ne.s32.totalorder %s63, %s64
      %p73 = scmp.eq.s32.totalorder %s20, 0
      %p74 = por %p72, %p73
      %p75 = scmp.ne.s32.totalorder %s63, %s64
      %p76 = scmp.eq.s32.totalorder %s21, 1
      %p77 = por %p75, %p76
      %p79 = scmp.ne.s32.totalorder %s64, %s78
      %p80 = scmp.eq.s32.totalorder %s21, 0
      %p81 = por %p79, %p80
      %s83 = sadd.s32 %s82, 1
      %p86 = scmp.eq.s32.totalorder %s15, 1
      %p87 = scmp.ne.s32.totalorder %s82, %s84
      %p88 = scmp.eq.s32.totalorder %s15, 0
      %p89 = por %p87, %p88
      %p90 = scmp.ne.s32.totalorder %s82, %s84
      %p91 = scmp.eq.s32.totalorder %s20, 1
      %p92 = por %p90, %p91
      %p93 = scmp.ne.s32.totalorder %s84, %s85
      %p94 = scmp.eq.s32.totalorder %s20, 0
      %p95 = por %p93, %p94
      %p96 = scmp.ne.s32.totalorder %s84, %s85
      %p97 = scmp.eq.s32.totalorder %s21, 1
      %p98 = por %p96, %p97
      %p100 = scmp.ne.s32.totalorder %s85, %s99
      %p101 = scmp.eq.s32.totalorder %s21, 0
      %p102 = por %p100, %p101
      %s104 = sadd.s32 %s103, 1
      %p107 = scmp.eq.s32.totalorder %s15, 1
      %p108 = scmp.ne.s32.totalorder %s103, %s105
      %p109 = scmp.eq.s32.totalorder %s15, 0
      %p110 = por %p108, %p109
      %p111 = scmp.ne.s32.totalorder %s103, %s105
      %p112 = scmp.eq.s32.totalorder %s20, 1
      %p113 = por %p111, %p112
      %p114 = scmp.ne.s32.totalorder %s105, %s106
      %p115 = scmp.eq.s32.totalorder %s20, 0
      %p116 = por %p114, %p115
      %p117 = scmp.ne.s32.totalorder %s105, %s106
      %p118 = scmp.eq.s32.totalorder %s21, 1
      %p119 = por %p117, %p118
      %p121 = scmp.ne.s32.totalorder %s106, %s120
      %p122 = scmp.eq.s32.totalorder %s21, 0
      %p123 = por %p121, %p122
      %s125 = sadd.s32 %s124, 1
      %p128 = scmp.eq.s32.totalorder %s15, 1
      %p129 = scmp.ne.s32.totalorder %s124, %s126
      %p130 = scmp.eq.s32.totalorder %s15, 0
      %p131 = por %p129, %p130
      %p132 = scmp.ne.s32.totalorder %s124, %s126
      %p133 = scmp.eq.s32.totalorder %s20, 1
      %p134 = por %p132, %p133
      %p135 = scmp.ne.s32.totalorder %s126, %s127
      %p136 = scmp.eq.s32.totalorder %s20, 0
      %p137 = por %p135, %p136
      %p138 = scmp.ne.s32.totalorder %s126, %s127
      %p139 = scmp.eq.s32.totalorder %s21, 1
      %p140 = por %p138, %p139
      %p142 = scmp.ne.s32.totalorder %s127, %s141
      %p143 = scmp.eq.s32.totalorder %s21, 0
      %p144 = por %p142, %p143
      %s146 = sadd.s32 %s145, 1
      %p149 = scmp.eq.s32.totalorder %s15, 1
      %p150 = scmp.ne.s32.totalorder %s145, %s147
      %p151 = scmp.eq.s32.totalorder %s15, 0
      %p152 = por %p150, %p151
      %p153 = scmp.ne.s32.totalorder %s145, %s147
      %p154 = scmp.eq.s32.totalorder %s20, 1
      %p155 = por %p153, %p154
      %p156 = scmp.ne.s32.totalorder %s147, %s148
      %p157 = scmp.eq.s32.totalorder %s20, 0
      %p158 = por %p156, %p157
      %p159 = scmp.ne.s32.totalorder %s147, %s148
      %p160 = scmp.eq.s32.totalorder %s21, 1
      %p161 = por %p159, %p160
      %p163 = scmp.ne.s32.totalorder %s148, %s162
      %p164 = scmp.eq.s32.totalorder %s21, 0
      %p165 = por %p163, %p164
      %s166 = ssub.s32 %s22, %s34
      %s167 = ssub.s32 %s23, %s30
      %s168 = sor.u32 %s166, %s167
      %p169 = scmp.eq.s32.totalorder %s168, 0
      %s171 = sadd.s32 %s170, 1
      %s172 = scalar_select %p169, %s170, %s171
      %p175 = pneg %p169
      %p176 = scmp.eq.s32.totalorder %s15, 1
      %p177 = por %p175, %p176
      %p178 = scmp.ne.s32.totalorder %s170, %s173
      %p179 = scmp.eq.s32.totalorder %s15, 0
      %p180 = por %p178, %p179
      %p181 = scmp.ne.s32.totalorder %s170, %s173
      %p182 = scmp.eq.s32.totalorder %s20, 1
      %p183 = por %p181, %p182
      %p184 = scmp.ne.s32.totalorder %s173, %s174
      %p185 = scmp.eq.s32.totalorder %s20, 0
      %p186 = por %p184, %p185
      %p187 = scmp.ne.s32.totalorder %s173, %s174
      %p188 = scmp.eq.s32.totalorder %s21, 1
      %p189 = por %p187, %p188
      %p191 = scmp.ne.s32.totalorder %s174, %s190
      %p192 = scmp.eq.s32.totalorder %s21, 0
      %p193 = por %p191, %p192
      %p194 = scmp.le.s32.totalorder 1, %s15
      %p195 = scmp.lt.s32.totalorder %s15, 3
      %p196 = pnand %p194, %p195
      %p197 = pneg %p196
      // Predicated region
      $region9: #{tpu_custom_call.1} parent=5 // pred_check
        _
      $region10: #{tpu_custom_call.1} parent=5 // pred_check_branch
        %199 = sbr.rel (%p196) target = $region12
      $region11: #{tpu_custom_call.1} parent=5 // pred_region
        %s200 = ssub.s32 %s15, 1
        // Predicated region
        $region13: #{tpu_custom_call.1} parent=11 // pred_check
          %p201 = pneg %p74
        $region14: #{tpu_custom_call.1} parent=11 // pred_check_branch
          %203 = sbr.rel (%p201) target = $region16
        $region15: #{tpu_custom_call.1} parent=11 // pred_region
          _
        $region16: #{tpu_custom_call.1} parent=11 // pred_fallthru
          _
        // Predicated region
        $region17: #{tpu_custom_call.1} parent=11 // pred_check
          %p204 = pneg %p95
        $region18: #{tpu_custom_call.1} parent=11 // pred_check_branch
          %206 = sbr.rel (%p204) target = $region20
        $region19: #{tpu_custom_call.1} parent=11 // pred_region
          _
        $region20: #{tpu_custom_call.1} parent=11 // pred_fallthru
          _
        // Predicated region
        $region21: #{tpu_custom_call.1} parent=11 // pred_check
          %p207 = pneg %p116
        $region22: #{tpu_custom_call.1} parent=11 // pred_check_branch
          %209 = sbr.rel (%p207) target = $region24
        $region23: #{tpu_custom_call.1} parent=11 // pred_region
          _
        $region24: #{tpu_custom_call.1} parent=11 // pred_fallthru
          _
        // Predicated region
        $region25: #{tpu_custom_call.1} parent=11 // pred_check
          %p210 = pneg %p137
        $region26: #{tpu_custom_call.1} parent=11 // pred_check_branch
          %212 = sbr.rel (%p210) target = $region28
        $region27: #{tpu_custom_call.1} parent=11 // pred_region
          _
        $region28: #{tpu_custom_call.1} parent=11 // pred_fallthru
          _
        // Predicated region
        $region29: #{tpu_custom_call.1} parent=11 // pred_check
          %p213 = pneg %p158
        $region30: #{tpu_custom_call.1} parent=11 // pred_check_branch
          %215 = sbr.rel (%p213) target = $region32
        $region31: #{tpu_custom_call.1} parent=11 // pred_region
          _
        $region32: #{tpu_custom_call.1} parent=11 // pred_fallthru
          _
      $region12: #{tpu_custom_call.1} parent=5 // pred_fallthru
        _
      %p216 = scmp.lt.s32.totalorder %s15, 2
      // Predicated region
      $region33: #{tpu_custom_call.1} parent=5 // pred_check
        %p217 = pneg %p216
      $region34: #{tpu_custom_call.1} parent=5 // pred_check_branch
        %219 = sbr.rel (%p217) target = $region36
      $region35: #{tpu_custom_call.1} parent=5 // pred_region
        // Predicated region
        $region37: #{tpu_custom_call.1} parent=35 // pred_check
          %p220 = pneg %p47
        $region38: #{tpu_custom_call.1} parent=35 // pred_check_branch
          %222 = sbr.rel (%p220) target = $region40
        $region39: #{tpu_custom_call.1} parent=35 // pred_region
          %p223 = scmp.lt.s32.totalorder %s22, 1
          %s224 = scalar_select %p223, %s22, 1
          %s225 = smul.addr %s224, 8
          %s226 = scalar_lea.vmem %s0, %s225
        $region40: #{tpu_custom_call.1} parent=35 // pred_fallthru
          _
      $region36: #{tpu_custom_call.1} parent=5 // pred_fallthru
        _
      %p227 = scmp.le.s32.totalorder 1, %s15
      %p228 = scmp.lt.s32.totalorder %s15, 3
      %p229 = pnand %p227, %p228
      %p230 = pneg %p229
      // Predicated region
      $region41: #{tpu_custom_call.1} parent=5 // pred_check
        _
      $region42: #{tpu_custom_call.1} parent=5 // pred_check_branch
        %232 = sbr.rel (%p229) target = $region44
      $region43: #{tpu_custom_call.1} parent=5 // pred_region
        %s233 = ssub.s32 %s15, 1
        %p234 = scmp.lt.s32.totalorder %s24, 1
        %s235 = scalar_select %p234, %s24, 1
        %s236 = smul.addr %s235, 8
        %s237 = scalar_lea.vmem %s0, %s236
        %p238 = pneg %p53
        %p239 = pneg %p50
        %p240 = pneg %p74
        %p241 = pneg %p71
        %p242 = pneg %p95
        %p243 = pneg %p92
        %p244 = pneg %p116
        %p245 = pneg %p113
        %p246 = pneg %p137
        %p247 = pneg %p134
        %p248 = pneg %p158
        %p249 = pneg %p155
        %p250 = pneg %p186
        %p251 = pneg %p183
        %s252 = sand.u32 %s173, 1
        %s253 = scalar_lea.sflag [#allocation7], %s252
        %s254 = sand.u32 %s173, 1
        %s255 = smul.addr %s254, 8
        %s256 = scalar_lea.vmem [#allocation6], %s255
        %p257 = scmp.lt.s32.totalorder %s24, 1
        %s258 = scalar_select %p257, %s24, 1
        %s259 = smul.addr %s258, 8
        %s260 = scalar_lea.vmem %s0, %s259
        %p262 = scmp.eq.s32.totalorder %s25, 0
        // Predicated region
        $region45: #{tpu_custom_call.1} parent=43 // pred_check
          %p263 = pneg %p262
        $region46: #{tpu_custom_call.1} parent=43 // pred_check_branch
          %265 = sbr.rel (%p263) target = $region48
        $region47: #{tpu_custom_call.1} parent=43 // pred_region
          %v266 = vld [vmem:[%s260] sm:$0xff]
          %v267 = vmul.f32 %v266, %v266
          %vm268 = vcmask 261120
          %v269 = vsel %vm268, %v267, 0.0
          %270 = vadd.xlane.f32.xlu0 %v269
          %v271 = vpop.xlane.xlu0 %270
          %v272 = vmax.f32 %v271, 1e-24
          %v273 = vrsqrt.pop %v272
          %v274 = vmul.f32 %v266, %v273
          %v275 = vld [vmem:[%s1] sm:$0x1]
          %v277 = vlaneseq
          %v278 = vshrl.u32 %v277, 7
          %v279 = vsub.s32 0, %v278
          %v280 = vrot.slane %v275, %v279
          %v282 = vmul.f32 %v274, %v280
          %v283 = vpack.c.bf16 %v282, %v282
          %vm284 = vcmask 257024
          %285 = vst.msk [vmem:[#allocation2] sm:$0xf] %vm284, %v283
          %v286 = vld [vmem:[%s3] sm:$0xf]
          %v287 = vld [vmem:[%s3 + $0x4] sm:$0xf]
          %v288 = vld [vmem:[%s3 + $0x8] sm:$0xf]
          %v289 = vld [vmem:[%s3 + $0xc] sm:$0xf]
          %v290 = vld [vmem:[%s3 + $0x10] sm:$0xf]
          %v291 = vld [vmem:[%s3 + $0x14] sm:$0xf]
          %v292 = vld [vmem:[%s3 + $0x18] sm:$0xf]
          %v293 = vld [vmem:[%s3 + $0x1c] sm:$0xf]
          %v302 = vunpack.c.l.b16 %v286
          %v303 = vunpack.c.l.b16 %v287
          %v304 = vunpack.c.l.b16 %v288
          %v305 = vunpack.c.l.b16 %v289
          %v306 = vunpack.c.l.b16 %v290
          %v307 = vunpack.c.l.b16 %v291
          %v308 = vunpack.c.l.b16 %v292
          %v309 = vunpack.c.l.b16 %v293
          %v310 = vpack.c.b16 %v303, %v302
          %v311 = vpack.c.b16 %v305, %v304
          %v312 = vpack.c.b16 %v307, %v306
          %v313 = vpack.c.b16 %v309, %v308
          %v315 = vsel %vm268, %v310, 0
          %v318 = vsel %vm268, %v311, 0
          %v321 = vsel %vm268, %v312, 0
          %v324 = vsel %vm268, %v313, 0
          %v327 = vsel %vm268, %v283, 0
          %329 = vmatprep.subr.bf16.mxu0 0
          %330 = vmatpush1.bf16.xpose.msra.mxu0 0
          %331 = vmatprep.subr.bf16.mxu0 0
          %332 = vmatpush1.bf16.xpose.msra.mxu0 0
          %333 = vmatprep.subr.bf16.mxu0 0
          %334 = vmatpush1.bf16.xpose.msra.mxu0 0
          %335 = vmatprep.subr.bf16.mxu0 0
          %336 = vmatpush1.bf16.xpose.msra.mxu0 0
          %337 = vmatprep.subr.bf16.mxu0 0
          %338 = vmatpush1.bf16.xpose.msra.mxu0 0
          %339 = vmatprep.subr.bf16.mxu0 0
          %340 = vmatpush1.bf16.xpose.msra.mxu0 0
          %341 = vmatprep.subr.bf16.mxu0 0
          %342 = vmatpush1.bf16.xpose.msra.mxu0 0
          %343 = vmatprep.subr.bf16.mxu0 0
          %344 = vmatpush1.bf16.xpose.msra.mxu0 %v327
          %345 = vmatprep.subr.bf16.mxu0 0
          %346 = vmatpush2.bf16.xpose.msra.mxu0 0
          %347 = vmatprep.subr.bf16.mxu0 0
          %348 = vmatpush2.bf16.xpose.msra.mxu0 0
          %349 = vmatprep.subr.bf16.mxu0 0
          %350 = vmatpush2.bf16.xpose.msra.mxu0 0
          %351 = vmatprep.subr.bf16.mxu0 0
          %352 = vmatpush2.bf16.xpose.msra.mxu0 0
          %353 = vmatprep.subr.bf16.mxu0 0
          %354 = vmatpush2.bf16.xpose.msra.mxu0 0
          %355 = vmatprep.subr.bf16.mxu0 0
          %356 = vmatpush2.bf16.xpose.msra.mxu0 0
          %357 = vmatprep.subr.bf16.mxu0 0
          %358 = vmatpush2.bf16.xpose.msra.mxu0 0
          %359 = vmatprep.subr.bf16.mxu0 0
          %360 = vmatpush2.bf16.xpose.msra.mxu0 0
          %361 = vmatprep.mubr.bf16.mxu0 0
          %362 = vmatmul.mubr.bf16.gmra.mxu0 %v315
          %v363 = vpop.f32.mrf.mxu0
          %v364 = vadd.f32 0.0, %v363
          %v365 = vpop.f32.mrf.mxu0
          %v366 = vpop.f32.mrf.mxu0
          %v367 = vadd.f32 0.0, %v366
          %v368 = vpop.f32.mrf.mxu0
          %369 = vmatprep.mubr.bf16.mxu0 0
          %370 = vmatmul.mubr.bf16.gmra.mxu0 %v318
          %v371 = vpop.f32.mrf.mxu0
          %v372 = vadd.f32 0.0, %v371
          %v373 = vpop.f32.mrf.mxu0
          %v374 = vpop.f32.mrf.mxu0
          %v375 = vadd.f32 0.0, %v374
          %v376 = vpop.f32.mrf.mxu0
          %377 = vmatprep.mubr.bf16.mxu0 0
          %378 = vmatmul.mubr.bf16.gmra.mxu0 %v321
          %v379 = vpop.f32.mrf.mxu0
          %v380 = vadd.f32 0.0, %v379
          %v381 = vpop.f32.mrf.mxu0
          %v382 = vpop.f32.mrf.mxu0
          %v383 = vadd.f32 0.0, %v382
          %v384 = vpop.f32.mrf.mxu0
          %385 = vmatprep.mubr.bf16.mxu0 0
          %386 = vmatmul.mubr.bf16.gmra.mxu0 %v324
          %v387 = vpop.f32.mrf.mxu0
          %v388 = vadd.f32 0.0, %v387
          %v389 = vpop.f32.mrf.mxu0
          %v390 = vpop.f32.mrf.mxu0
          %v391 = vadd.f32 0.0, %v390
          %v392 = vpop.f32.mrf.mxu0
          %393 = vdwg.mxu0
          %v394 = vpack.c.bf16 %v367, %v364
          %v395 = vpack.c.bf16 %v375, %v372
          %v396 = vpack.c.bf16 %v383, %v380
          %v397 = vpack.c.bf16 %v391, %v388
          %v398 = vld [vmem:[%s4] sm:$0xf]
          %v399 = vld [vmem:[%s4 + $0x4] sm:$0xf]
          %v400 = vld [vmem:[%s4 + $0x8] sm:$0xf]
          %v401 = vld [vmem:[%s4 + $0xc] sm:$0xf]
          %v402 = vld [vmem:[%s4 + $0x10] sm:$0xf]
          %v403 = vld [vmem:[%s4 + $0x14] sm:$0xf]
          %v404 = vld [vmem:[%s4 + $0x18] sm:$0xf]
          %v405 = vld [vmem:[%s4 + $0x1c] sm:$0xf]
          %v414 = vunpack.c.l.b16 %v398
          %v415 = vunpack.c.l.b16 %v399
          %v416 = vunpack.c.l.b16 %v400
          %v417 = vunpack.c.l.b16 %v401
          %v418 = vunpack.c.l.b16 %v402
          %v419 = vunpack.c.l.b16 %v403
          %v420 = vunpack.c.l.b16 %v404
          %v421 = vunpack.c.l.b16 %v405
          %v422 = vpack.c.b16 %v415, %v414
          %v423 = vpack.c.b16 %v417, %v416
          %v424 = vpack.c.b16 %v419, %v418
          %v425 = vpack.c.b16 %v421, %v420
          %v427 = vsel %vm268, %v422, 0
          %v430 = vsel %vm268, %v423, 0
          %v433 = vsel %vm268, %v424, 0
          %v436 = vsel %vm268, %v425, 0
          %438 = vmatprep.subr.bf16.mxu0 0
          %439 = vmatpush1.bf16.xpose.msra.mxu0 0
          %440 = vmatprep.subr.bf16.mxu0 0
          %441 = vmatpush1.bf16.xpose.msra.mxu0 0
          %442 = vmatprep.subr.bf16.mxu0 0
          %443 = vmatpush1.bf16.xpose.msra.mxu0 0
          %444 = vmatprep.subr.bf16.mxu0 0
          %445 = vmatpush1.bf16.xpose.msra.mxu0 0
          %446 = vmatprep.subr.bf16.mxu0 0
          %447 = vmatpush1.bf16.xpose.msra.mxu0 0
          %448 = vmatprep.subr.bf16.mxu0 0
          %449 = vmatpush1.bf16.xpose.msra.mxu0 0
          %450 = vmatprep.subr.bf16.mxu0 0
          %451 = vmatpush1.bf16.xpose.msra.mxu0 0
          %452 = vmatprep.subr.bf16.mxu0 0
          %453 = vmatpush1.bf16.xpose.msra.mxu0 %v327
          %454 = vmatprep.subr.bf16.mxu0 0
          %455 = vmatpush2.bf16.xpose.msra.mxu0 0
          %456 = vmatprep.subr.bf16.mxu0 0
          %457 = vmatpush2.bf16.xpose.msra.mxu0 0
          %458 = vmatprep.subr.bf16.mxu0 0
          %459 = vmatpush2.bf16.xpose.msra.mxu0 0
          %460 = vmatprep.subr.bf16.mxu0 0
          %461 = vmatpush2.bf16.xpose.msra.mxu0 0
          %462 = vmatprep.subr.bf16.mxu0 0
          %463 = vmatpush2.bf16.xpose.msra.mxu0 0
          %464 = vmatprep.subr.bf16.mxu0 0
          %465 = vmatpush2.bf16.xpose.msra.mxu0 0
          %466 = vmatprep.subr.bf16.mxu0 0
          %467 = vmatpush2.bf16.xpose.msra.mxu0 0
          %468 = vmatprep.subr.bf16.mxu0 0
          %469 = vmatpush2.bf16.xpose.msra.mxu0 0
          %470 = vmatprep.mubr.bf16.mxu0 0
          %471 = vmatmul.mubr.bf16.gmra.mxu0 %v427
          %v472 = vpop.f32.mrf.mxu0
          %v473 = vadd.f32 0.0, %v472
          %v474 = vpop.f32.mrf.mxu0
          %v475 = vpop.f32.mrf.mxu0
          %v476 = vadd.f32 0.0, %v475
          %v477 = vpop.f32.mrf.mxu0
          %478 = vmatprep.mubr.bf16.mxu0 0
          %479 = vmatmul.mubr.bf16.gmra.mxu0 %v430
          %v480 = vpop.f32.mrf.mxu0
          %v481 = vadd.f32 0.0, %v480
          %v482 = vpop.f32.mrf.mxu0
          %v483 = vpop.f32.mrf.mxu0
          %v484 = vadd.f32 0.0, %v483
          %v485 = vpop.f32.mrf.mxu0
          %486 = vmatprep.mubr.bf16.mxu0 0
          %487 = vmatmul.mubr.bf16.gmra.mxu0 %v433
          %v488 = vpop.f32.mrf.mxu0
          %v489 = vadd.f32 0.0, %v488
          %v490 = vpop.f32.mrf.mxu0
          %v491 = vpop.f32.mrf.mxu0
          %v492 = vadd.f32 0.0, %v491
          %v493 = vpop.f32.mrf.mxu0
          %494 = vmatprep.mubr.bf16.mxu0 0
          %495 = vmatmul.mubr.bf16.gmra.mxu0 %v436
          %v496 = vpop.f32.mrf.mxu0
          %v497 = vadd.f32 0.0, %v496
          %v498 = vpop.f32.mrf.mxu0
          %v499 = vpop.f32.mrf.mxu0
          %v500 = vadd.f32 0.0, %v499
          %v501 = vpop.f32.mrf.mxu0
          %502 = vdwg.mxu0
          %v503 = vpack.c.bf16 %v476, %v473
          %v504 = vpack.c.bf16 %v484, %v481
          %v505 = vpack.c.bf16 %v492, %v489
          %v506 = vpack.c.bf16 %v500, %v497
          %v508 = vunpack.c.l.b16 %v394
          %v509 = vunpack.c.h.b16 %v394
          %v510 = vpack.c.b16 %v508, %v508
          %v511 = vpack.c.b16 %v509, %v509
          %vm514 = vcmask 60416
          %515 = vst.msk [vmem:[#allocation3] sm:$0xf] %vm514, %v510
          %516 = vst.msk [vmem:[#allocation3 + $0x4] sm:$0xf] %vm514, %v511
          %v518 = vunpack.c.l.b16 %v503
          %v519 = vunpack.c.h.b16 %v503
          %v520 = vpack.c.b16 %v518, %v518
          %v521 = vpack.c.b16 %v519, %v519
          %524 = vst.msk [vmem:[#allocation4] sm:$0xf] %vm514, %v520
          %525 = vst.msk [vmem:[#allocation4 + $0x4] sm:$0xf] %vm514, %v521
          %v527 = vunpack.c.l.b16 %v395
          %v528 = vunpack.c.h.b16 %v395
          %v529 = vpack.c.b16 %v527, %v527
          %v530 = vpack.c.b16 %v528, %v528
          %s533 = scalar_lea.vmem [#allocation3], 8
          %534 = vst.msk [vmem:[%s533] sm:$0xf] %vm514, %v529
          %535 = vst.msk [vmem:[%s533 + $0x4] sm:$0xf] %vm514, %v530
          %v537 = vunpack.c.l.b16 %v504
          %v538 = vunpack.c.h.b16 %v504
          %v539 = vpack.c.b16 %v537, %v537
          %v540 = vpack.c.b16 %v538, %v538
          %s543 = scalar_lea.vmem [#allocation4], 8
          %544 = vst.msk [vmem:[%s543] sm:$0xf] %vm514, %v539
          %545 = vst.msk [vmem:[%s543 + $0x4] sm:$0xf] %vm514, %v540
          %v547 = vunpack.c.l.b16 %v396
          %v548 = vunpack.c.h.b16 %v396
          %v549 = vpack.c.b16 %v547, %v547
          %v550 = vpack.c.b16 %v548, %v548
          %s553 = scalar_lea.vmem [#allocation3], 16
          %554 = vst.msk [vmem:[%s553] sm:$0xf] %vm514, %v549
          %555 = vst.msk [vmem:[%s553 + $0x4] sm:$0xf] %vm514, %v550
          %v557 = vunpack.c.l.b16 %v505
          %v558 = vunpack.c.h.b16 %v505
          %v559 = vpack.c.b16 %v557, %v557
          %v560 = vpack.c.b16 %v558, %v558
          %s563 = scalar_lea.vmem [#allocation4], 16
          %564 = vst.msk [vmem:[%s563] sm:$0xf] %vm514, %v559
          %565 = vst.msk [vmem:[%s563 + $0x4] sm:$0xf] %vm514, %v560
          %v567 = vunpack.c.l.b16 %v397
          %v568 = vunpack.c.h.b16 %v397
          %v569 = vpack.c.b16 %v567, %v567
          %v570 = vpack.c.b16 %v568, %v568
          %s573 = scalar_lea.vmem [#allocation3], 24
          %574 = vst.msk [vmem:[%s573] sm:$0xf] %vm514, %v569
          %575 = vst.msk [vmem:[%s573 + $0x4] sm:$0xf] %vm514, %v570
          %v577 = vunpack.c.l.b16 %v506
          %v578 = vunpack.c.h.b16 %v506
          %v579 = vpack.c.b16 %v577, %v577
          %v580 = vpack.c.b16 %v578, %v578
          %s583 = scalar_lea.vmem [#allocation4], 24
          %584 = vst.msk [vmem:[%s583] sm:$0xf] %vm514, %v579
          %585 = vst.msk [vmem:[%s583 + $0x4] sm:$0xf] %vm514, %v580
        $region48: #{tpu_custom_call.1} parent=43 // pred_fallthru
          _
        %s586 = smul.u32 %s25, 8
        %s587 = sshra.s32 %s586, 3
        %s588 = sand.u32 %s586, 7
        %s589 = smul.addr %s587, 4
        %s590 = scalar_lea.vmem [#allocation2], %s589
        %v591 = vld [vmem:[%s590] sm:$0xf]
        %vm592 = vcmask 261120
        %593 = vst.msk [vmem:[#allocation5] sm:$0xff] %vm592, 0.0
        loop: start=0, step=1, limit=4
        $region49: #{tpu_custom_call.1} parent=43 // loop_pre_header
          _
        $region50: #{tpu_custom_call.1} parent=43 // loop_header
          %s595 = sphi 0, %s599
          %p596 = scmp.ge.s32.totalorder %s595, 4
        $region51: #{tpu_custom_call.1} parent=43 // loop_header_branch
          %598 = sbr.rel (%p596) target = $region55
        $region52: #{tpu_custom_call.1} parent=43 // loop_body
          %s600 = smul.u32 %s595, 4
          %s601 = smul.addr %s600, 4
          %s602 = scalar_lea.vmem %s2, %s601
          %v603 = vld [vmem:[%s602] sm:$0xf]
          %v604 = vld [vmem:[%s602 + $0x4] sm:$0xf]
          %v605 = vld [vmem:[%s602 + $0x8] sm:$0xf]
          %v606 = vld [vmem:[%s602 + $0xc] sm:$0xf]
          %v611 = vunpack.c.l.b16 %v603
          %v612 = vunpack.c.l.b16 %v604
          %v613 = vunpack.c.l.b16 %v605
          %v614 = vunpack.c.l.b16 %v606
          %v615 = vpack.c.b16 %v612, %v611
          %v616 = vpack.c.b16 %v614, %v613
          %v620 = vsel %vm592, %v591, 0
          %622 = vmatprep.subr.bf16.mxu0 0
          %623 = vmatpush1.bf16.msra.mxu0 0
          %624 = vmatprep.subr.bf16.mxu0 0
          %625 = vmatpush1.bf16.msra.mxu0 0
          %626 = vmatprep.subr.bf16.mxu0 0
          %627 = vmatpush1.bf16.msra.mxu0 0
          %628 = vmatprep.subr.bf16.mxu0 0
          %629 = vmatpush1.bf16.msra.mxu0 0
          %630 = vmatprep.subr.bf16.mxu0 0
          %631 = vmatpush1.bf16.msra.mxu0 0
          %632 = vmatprep.subr.bf16.mxu0 0
          %633 = vmatpush1.bf16.msra.mxu0 0
          %634 = vmatprep.subr.bf16.mxu0 0
          %635 = vmatpush1.bf16.msra.mxu0 %v616
          %636 = vmatprep.subr.bf16.mxu0 0
          %637 = vmatpush1.bf16.msra.mxu0 %v615
          %638 = vmatprep.subr.bf16.mxu0 0
          %639 = vmatpush2.bf16.msra.mxu0 0
          %640 = vmatprep.subr.bf16.mxu0 0
          %641 = vmatpush2.bf16.msra.mxu0 0
          %642 = vmatprep.subr.bf16.mxu0 0
          %643 = vmatpush2.bf16.msra.mxu0 0
          %644 = vmatprep.subr.bf16.mxu0 0
          %645 = vmatpush2.bf16.msra.mxu0 0
          %646 = vmatprep.subr.bf16.mxu0 0
          %647 = vmatpush2.bf16.msra.mxu0 0
          %648 = vmatprep.subr.bf16.mxu0 0
          %649 = vmatpush2.bf16.msra.mxu0 0
          %650 = vmatprep.subr.bf16.mxu0 0
          %651 = vmatpush2.bf16.msra.mxu0 0
          %652 = vmatprep.subr.bf16.mxu0 0
          %653 = vmatpush2.bf16.msra.mxu0 0
          %654 = vmatprep.mubr.bf16.mxu0 0
          %655 = vmatmul.mubr.bf16.gmra.mxu0 %v620
          %v656 = vpop.f32.mrf.mxu0
          %v657 = vadd.f32 0.0, %v656
          %v658 = vpop.f32.mrf.mxu0
          %v659 = vpop.f32.mrf.mxu0
          %v660 = vpop.f32.mrf.mxu0
          %661 = vdwg.mxu0
          %v662 = vpack.c.bf16 %v657, %v657
          %s663 = smul.u32 %s595, 2
          %s664 = smul.addr %s663, 4
          %s665 = scalar_lea.vmem [#allocation3], %s664
          %v666 = vld [vmem:[%s665] sm:$0xf]
          %v667 = vld [vmem:[%s665 + $0x4] sm:$0xf]
          %v670 = vunpack.c.l.b16 %v666
          %v671 = vunpack.c.l.b16 %v667
          %v672 = vpack.c.b16 %v671, %v670
          %vm674 = vcmask 130048
          %v676 = vsel %vm674, %v662, 0
          %678 = vmatprep.subr.bf16.mxu0 0
          %679 = vmatpush1.bf16.msra.mxu0 0
          %680 = vmatprep.subr.bf16.mxu0 0
          %681 = vmatpush1.bf16.msra.mxu0 0
          %682 = vmatprep.subr.bf16.mxu0 0
          %683 = vmatpush1.bf16.msra.mxu0 0
          %684 = vmatprep.subr.bf16.mxu0 0
          %685 = vmatpush1.bf16.msra.mxu0 0
          %686 = vmatprep.subr.bf16.mxu0 0
          %687 = vmatpush1.bf16.msra.mxu0 0
          %688 = vmatprep.subr.bf16.mxu0 0
          %689 = vmatpush1.bf16.msra.mxu0 0
          %690 = vmatprep.subr.bf16.mxu0 0
          %691 = vmatpush1.bf16.msra.mxu0 0
          %692 = vmatprep.subr.bf16.mxu0 0
          %693 = vmatpush1.bf16.msra.mxu0 %v672
          %694 = vmatprep.subr.bf16.mxu0 0
          %695 = vmatpush2.bf16.msra.mxu0 0
          %696 = vmatprep.subr.bf16.mxu0 0
          %697 = vmatpush2.bf16.msra.mxu0 0
          %698 = vmatprep.subr.bf16.mxu0 0
          %699 = vmatpush2.bf16.msra.mxu0 0
          %700 = vmatprep.subr.bf16.mxu0 0
          %701 = vmatpush2.bf16.msra.mxu0 0
          %702 = vmatprep.subr.bf16.mxu0 0
          %703 = vmatpush2.bf16.msra.mxu0 0
          %704 = vmatprep.subr.bf16.mxu0 0
          %705 = vmatpush2.bf16.msra.mxu0 0
          %706 = vmatprep.subr.bf16.mxu0 0
          %707 = vmatpush2.bf16.msra.mxu0 0
          %708 = vmatprep.subr.bf16.mxu0 0
          %709 = vmatpush2.bf16.msra.mxu0 0
          %710 = vmatprep.mubr.bf16.mxu0 0
          %711 = vmatmul.mubr.bf16.gmra.mxu0 %v676
          %v712 = vpop.f32.mrf.mxu0
          %v713 = vadd.f32 0.0, %v712
          %v714 = vpop.f32.mrf.mxu0
          %v715 = vpop.f32.mrf.mxu0
          %v716 = vpop.f32.mrf.mxu0
          %717 = vdwg.mxu0
          %vm718 = vcmask 64512
          %v719 = vsel %vm718, %v713, -inf
          %720 = vmax.xlane.f32.xlu0 %v719
          %v721 = vpop.xlane.xlu0 %720
          %v722 = vsub.f32 %v713, %v721
          %v723 = vmul.f32 %v722, 1.442695
          %v724 = vpow.pop %v723
          %v725 = vsel %vm718, %v724, 0.0
          %726 = vadd.xlane.f32.xlu0 %v725
          %v727 = vpop.xlane.xlu0 %726
          %v728 = vpack.c.bf16 %v724, %v724
          %s729 = smul.addr %s663, 4
          %s730 = scalar_lea.vmem [#allocation4], %s729
          %v731 = vld [vmem:[%s730] sm:$0xf]
          %v732 = vld [vmem:[%s730 + $0x4] sm:$0xf]
          %v735 = vunpack.c.l.b16 %v731
          %v736 = vunpack.c.l.b16 %v732
          %v737 = vpack.c.b16 %v736, %v735
          %v739 = vsel %vm718, %v728, 0
          %v742 = vsel %vm718, %v737, 0
          %744 = vmatprep.subr.bf16.mxu0 0
          %745 = vmatpush1.bf16.xpose.msra.mxu0 0
          %746 = vmatprep.subr.bf16.mxu0 0
          %747 = vmatpush1.bf16.xpose.msra.mxu0 0
          %748 = vmatprep.subr.bf16.mxu0 0
          %749 = vmatpush1.bf16.xpose.msra.mxu0 0
          %750 = vmatprep.subr.bf16.mxu0 0
          %751 = vmatpush1.bf16.xpose.msra.mxu0 0
          %752 = vmatprep.subr.bf16.mxu0 0
          %753 = vmatpush1.bf16.xpose.msra.mxu0 0
          %754 = vmatprep.subr.bf16.mxu0 0
          %755 = vmatpush1.bf16.xpose.msra.mxu0 0
          %756 = vmatprep.subr.bf16.mxu0 0
          %757 = vmatpush1.bf16.xpose.msra.mxu0 0
          %758 = vmatprep.subr.bf16.mxu0 0
          %759 = vmatpush1.bf16.xpose.msra.mxu0 %v742
          %760 = vmatprep.subr.bf16.mxu0 0
          %761 = vmatpush2.bf16.xpose.msra.mxu0 0
          %762 = vmatprep.subr.bf16.mxu0 0
          %763 = vmatpush2.bf16.xpose.msra.mxu0 0
          %764 = vmatprep.subr.bf16.mxu0 0
          %765 = vmatpush2.bf16.xpose.msra.mxu0 0
          %766 = vmatprep.subr.bf16.mxu0 0
          %767 = vmatpush2.bf16.xpose.msra.mxu0 0
          %768 = vmatprep.subr.bf16.mxu0 0
          %769 = vmatpush2.bf16.xpose.msra.mxu0 0
          %770 = vmatprep.subr.bf16.mxu0 0
          %771 = vmatpush2.bf16.xpose.msra.mxu0 0
          %772 = vmatprep.subr.bf16.mxu0 0
          %773 = vmatpush2.bf16.xpose.msra.mxu0 0
          %774 = vmatprep.subr.bf16.mxu0 0
          %775 = vmatpush2.bf16.xpose.msra.mxu0 0
          %776 = vmatprep.mubr.bf16.mxu0 0
          %777 = vmatmul.mubr.bf16.gmra.mxu0 %v739
          %v778 = vpop.f32.mrf.mxu0
          %v779 = vadd.f32 0.0, %v778
          %v780 = vpop.f32.mrf.mxu0
          %v781 = vpop.f32.mrf.mxu0
          %v782 = vpop.f32.mrf.mxu0
          %783 = vdwg.mxu0
          %v784 = vrcp.pop %v727
          %v785 = vmul.f32 %v779, %v784
          %v786 = vld [vmem:[#allocation5] sm:$0xff]
          %v787 = vpack.c.bf16 %v785, %v785
          %s788 = smul.addr %s663, 4
          %s789 = scalar_lea.vmem %s5, %s788
          %v790 = vld [vmem:[%s789] sm:$0xf]
          %v791 = vld [vmem:[%s789 + $0x4] sm:$0xf]
          %v794 = vunpack.c.l.b16 %v790
          %v795 = vunpack.c.l.b16 %v791
          %v796 = vpack.c.b16 %v795, %v794
          %v799 = vsel %vm674, %v787, 0
          %801 = vmatprep.subr.bf16.mxu0 0
          %802 = vmatpush1.bf16.msra.mxu0 0
          %803 = vmatprep.subr.bf16.mxu0 0
          %804 = vmatpush1.bf16.msra.mxu0 0
          %805 = vmatprep.subr.bf16.mxu0 0
          %806 = vmatpush1.bf16.msra.mxu0 0
          %807 = vmatprep.subr.bf16.mxu0 0
          %808 = vmatpush1.bf16.msra.mxu0 0
          %809 = vmatprep.subr.bf16.mxu0 0
          %810 = vmatpush1.bf16.msra.mxu0 0
          %811 = vmatprep.subr.bf16.mxu0 0
          %812 = vmatpush1.bf16.msra.mxu0 0
          %813 = vmatprep.subr.bf16.mxu0 0
          %814 = vmatpush1.bf16.msra.mxu0 0
          %815 = vmatprep.subr.bf16.mxu0 0
          %816 = vmatpush1.bf16.msra.mxu0 %v796
          %817 = vmatprep.subr.bf16.mxu0 0
          %818 = vmatpush2.bf16.msra.mxu0 0
          %819 = vmatprep.subr.bf16.mxu0 0
          %820 = vmatpush2.bf16.msra.mxu0 0
          %821 = vmatprep.subr.bf16.mxu0 0
          %822 = vmatpush2.bf16.msra.mxu0 0
          %823 = vmatprep.subr.bf16.mxu0 0
          %824 = vmatpush2.bf16.msra.mxu0 0
          %825 = vmatprep.subr.bf16.mxu0 0
          %826 = vmatpush2.bf16.msra.mxu0 0
          %827 = vmatprep.subr.bf16.mxu0 0
          %828 = vmatpush2.bf16.msra.mxu0 0
          %829 = vmatprep.subr.bf16.mxu0 0
          %830 = vmatpush2.bf16.msra.mxu0 0
          %831 = vmatprep.subr.bf16.mxu0 0
          %832 = vmatpush2.bf16.msra.mxu0 0
          %833 = vmatprep.mubr.bf16.mxu0 0
          %834 = vmatmul.mubr.bf16.gmra.mxu0 %v799
          %v835 = vpop.f32.mrf.mxu0
          %v836 = vadd.f32 0.0, %v835
          %v837 = vpop.f32.mrf.mxu0
          %v838 = vpop.f32.mrf.mxu0
          %v839 = vpop.f32.mrf.mxu0
          %840 = vdwg.mxu0
          %v841 = vadd.f32 %v786, %v836
          %842 = vst.msk [vmem:[#allocation5] sm:$0xff] %vm592, %v841
        $region53: #{tpu_custom_call.1} parent=43 // loop_footer
          %s599 = sadd.s32 1, %s595
        $region54: #{tpu_custom_call.1} parent=43 // loop_footer_branch
          %594 = sbr.rel target = $region50
        $region55: #{tpu_custom_call.1} parent=43 // loop_exit
          _
        %v843 = vld [vmem:[#allocation5] sm:$0xff]
        %844 = vst.msk [vmem:[%s256] sm:$0xff] %vm592, %v843
        %s845 = sand.u32 %s173, 1
        %s846 = scalar_lea.sflag [#allocation7], %s845
        %s847 = sand.u32 %s173, 1
        %s848 = smul.addr %s847, 8
        %s849 = scalar_lea.vmem [#allocation6], %s848
        // Predicated region
        $region56: #{tpu_custom_call.1} parent=43 // pred_check
          %p850 = pneg %p183
        $region57: #{tpu_custom_call.1} parent=43 // pred_check_branch
          %852 = sbr.rel (%p850) target = $region59
        $region58: #{tpu_custom_call.1} parent=43 // pred_region
          %s854 = ssub.s32 128, 128
          %855 = vsyncadd %s846, %s854
          %s856 = sadd.s32 %s25, %s24
          %s857 = smul.addr %s856, 128
          %s858 = scalar_lea.hbm %s6, %s857
          %s860 = sshll.u32 %s849, 4
          %s861 = int_to_ptr.vmem [resolvable:$true] %s860
          %863 = dma.vmem_to_hbm [thread:$0]  %s861, 128, %s858, %s846
        $region59: #{tpu_custom_call.1} parent=43 // pred_fallthru
          _
      $region44: #{tpu_custom_call.1} parent=5 // pred_fallthru
        _
      %p864 = scmp.le.s32.totalorder 2, %s15
      // Predicated region
      $region60: #{tpu_custom_call.1} parent=5 // pred_check
        %p865 = pneg %p864
      $region61: #{tpu_custom_call.1} parent=5 // pred_check_branch
        %867 = sbr.rel (%p865) target = $region63
      $region62: #{tpu_custom_call.1} parent=5 // pred_region
        %s868 = ssub.s32 %s15, 2
        // Predicated region
        $region64: #{tpu_custom_call.1} parent=62 // pred_check
          %p869 = pneg %p189
        $region65: #{tpu_custom_call.1} parent=62 // pred_check_branch
          %871 = sbr.rel (%p869) target = $region67
        $region66: #{tpu_custom_call.1} parent=62 // pred_region
          %s872 = sand.u32 %s174, 1
          %s873 = scalar_lea.sflag [#allocation7], %s872
          %s874 = sand.u32 %s174, 1
          %s875 = smul.addr %s874, 8
          %s876 = scalar_lea.vmem [#allocation6], %s875
          %877 = dma.done %s873, 128
        $region67: #{tpu_custom_call.1} parent=62 // pred_fallthru
          _
      $region63: #{tpu_custom_call.1} parent=5 // pred_fallthru
        _
    $region6: #{tpu_custom_call.1} parent=1 // loop_footer
      %s19 = sadd.s32 1, %s15
    $region7: #{tpu_custom_call.1} parent=1 // loop_footer_branch
      %14 = sbr.rel target = $region3
    $region8: #{tpu_custom_call.1} parent=1 // loop_exit
      _
    %878 = vsyncpa [#allocation7], 1
    %s879 = scalar_lea.sflag [#allocation7], 1
    %880 = vsyncpa %s879, 1

</llo_original>
